<compile_context>
chip_gen: v6e
topology: v6e:2x2x1
jax: 0.10.0
libtpu: 0.0.40
codegen_flags: <defaults>
</compile_context>

<pallas_src>
import functools
import numpy as np
import jax
import jax.numpy as jnp
from jax.experimental import pallas as pl
from jax.experimental.pallas import tpu as pltpu

# ---- module hyperparameters (match PRODBSplineLayerMultiFeature.__init__) ----
DEGREE      = 3
NUM_KNOTS   = 8
NUM_NEURONS = 8          # must equal num_features for the broadcast in forward()
OUTPUT_DIM  = 4          # only used by the (unexercised) input_dim == 2 branch
INPUT_DIM   = NUM_NEURONS
BATCH       = 16

LANES = 128              # TPU lane width (fast axis)


def make_knots(degree, num_knots):
    k = np.concatenate([
        np.zeros(degree, dtype=np.float32),
        np.linspace(0.0, 1.0, num_knots - degree + 1, dtype=np.float32),
        np.ones(degree, dtype=np.float32),
    ])
    # python floats -> compile-time constants; zero-denominator checks become static
    return tuple(float(v) for v in k)


def _round_up(a, m):
    return ((a + m - 1) // m) * m


def _alpha_factory(x, t, k):
    """Memoized alpha_{j,k}(x) = (x - t[j]) / (t[j+k] - t[j]).

    Caller guarantees the denominator is nonzero.  Reciprocal is a compile-time
    constant; the (x - 0) subtraction is elided for leading zero knots."""
    cache = {}

    def alpha(j):
        if j not in cache:
            inv = 1.0 / (t[j + k] - t[j])
            v = x if t[j] == 0.0 else x - t[j]
            cache[j] = v if inv == 1.0 else v * inv
        return cache[j]

    return alpha


# --------------------------- Pallas kernel -----------------------------------
def spline_kernel(x_ref, cp_ref, bias_ref, out_ref, *, knots, degree, num_knots):
    # Flattened lane-dense layout:
    #   x_ref    (tr, LANES)        lane l holds feature (l % F) of some batch sample
    #   cp_ref   (num_knots, LANES) row i = control_p[i, :] tiled with period F
    #   bias_ref (1, LANES)         bias tiled with period F
    #   out_ref  (tr, LANES)        same layout as x_ref
    x = x_ref[...]
    cp = cp_ref[...]                 # single hoisted load; sliced in-register below
    bias = bias_ref[...]
    t = knots

    # ---- degree-0 indicators via shared (x >= knot) comparisons -------------
    ge_cache = {}

    def ge(v):
        if v not in ge_cache:
            ge_cache[v] = (x >= v).astype(jnp.float32)
        return ge_cache[v]

    basis = []
    for i in range(num_knots + degree):
        if t[i] == t[i + 1]:
            basis.append(None)                        # empty span: statically pruned
        else:
            basis.append(ge(t[i]) - ge(t[i + 1]))     # exactly 1{t[i] <= x < t[i+1]}

    # ---- degrees 1 .. degree-1: alpha-sharing Cox-de Boor DP -----------------
    for k in range(1, degree):
        alpha = _alpha_factory(x, t, k)
        nxt = []
        for i in range(len(basis) - 1):
            term = None
            if t[i + k] - t[i] != 0.0 and basis[i] is not None:
                term = alpha(i) * basis[i]
            if t[i + k + 1] - t[i + 1] != 0.0 and basis[i + 1] is not None:
                # (t[i+k+1] - x) / d2 == 1 - alpha_{i+1,k}  (same denominator)
                t2 = (1.0 - alpha(i + 1)) * basis[i + 1]
                term = t2 if term is None else term + t2
            nxt.append(term)
        basis = nxt

    # ---- final level (k = degree): fold control points into the DP -----------
    #   out = sum_j [ c_j * alpha_{j,deg} + c_{j-1} * (1 - alpha_{j,deg}) ] * B_{j,deg-1}
    # (both contributions to B_{j,deg-1} share the same denominator t[j+deg]-t[j])
    k = degree
    alpha = _alpha_factory(x, t, k)
    acc = None
    for j in range(len(basis)):                        # len(basis) == num_knots + 1
        if basis[j] is None:
            continue
        if t[j + k] - t[j] == 0.0:                     # both contributions vanish
            continue
        a = alpha(j)
        cj = cp[j:j + 1, :] if j < num_knots else None         # (1, LANES) rows;
        cjm1 = cp[j - 1:j, :] if j >= 1 else None              # row-level ops are cheap
        if cj is not None and cjm1 is not None:
            w = cjm1 + (cj - cjm1) * a
        elif cj is not None:
            w = cj * a
        else:
            w = cjm1 * (1.0 - a)
        contrib = w * basis[j]
        acc = contrib if acc is None else acc + contrib

    if acc is None:
        out_ref[...] = jnp.broadcast_to(bias, x.shape)
    else:
        out_ref[...] = acc + bias


# --------------------------- wrapper ------------------------------------------
def prod_bspline_forward(x, control_p, bias, *, degree=DEGREE, num_knots=NUM_KNOTS,
                         max_tile_rows=1024):
    batch, nfeat = x.shape
    # Lane layout requires the feature count to divide the 128-lane width.
    # TODO(synk): feature counts that do not divide 128 would need the older
    # feature-major (F, B) layout instead of the flattened one.
    assert LANES % nfeat == 0, "num_features must divide 128 for the lane-dense layout"
    knots = make_knots(degree, num_knots)

    x = x.astype(jnp.float32)
    total = batch * nfeat
    rows = pl.cdiv(total, LANES)

    # Tile rows: multiple of 8 (sublane), capped at max_tile_rows (512 KiB/buffer),
    # and chosen so the grid has >= 2 steps whenever there is enough work (v7x
    # has 2 TensorCores; "parallel" lets Mosaic split the batch axis).
    if rows > 8:
        tr = min(max_tile_rows, _round_up(pl.cdiv(rows, 2), 8))
    else:
        tr = 8
    padded_rows = pl.cdiv(rows, tr) * tr

    xflat = x.reshape(-1)
    pad = padded_rows * LANES - total
    if pad:
        xflat = jnp.pad(xflat, (0, pad))               # only the ragged tail, if any
    x2d = xflat.reshape(padded_rows, LANES)

    reps = LANES // nfeat
    cp_tiled = jnp.tile(control_p.astype(jnp.float32), (1, reps))              # (K, 128)
    bias_tiled = jnp.tile(bias.astype(jnp.float32).reshape(1, nfeat), (1, reps))  # (1, 128)

    kernel = functools.partial(spline_kernel, knots=knots, degree=degree,
                               num_knots=num_knots)

    n_elems = padded_rows * LANES
    cost = pl.CostEstimate(flops=130 * n_elems, transcendentals=0,
                           bytes_accessed=2 * n_elems * 4)

    out2d = pl.pallas_call(
        kernel,
        out_shape=jax.ShapeDtypeStruct((padded_rows, LANES), jnp.float32),
        grid=(padded_rows // tr,),
        in_specs=[
            pl.BlockSpec((tr, LANES), lambda i: (i, 0)),            # x tile
            pl.BlockSpec((num_knots, LANES), lambda i: (0, 0)),     # control points
            pl.BlockSpec((1, LANES), lambda i: (0, 0)),             # bias
        ],
        out_specs=pl.BlockSpec((tr, LANES), lambda i: (i, 0)),
        compiler_params=pltpu.CompilerParams(
            dimension_semantics=("parallel",),
            vmem_limit_bytes=32 * 1024 * 1024),
        cost_estimate=cost,
    )(x2d, cp_tiled, bias_tiled)

    out = out2d.reshape(-1)
    if pad:
        out = out[:total]
    return out.reshape(batch, nfeat)


# --------------------------- pure-JAX reference -------------------------------
def _basis_recursive(x, i, k, t):
    """Naive Cox-de Boor recursion (matches the PyTorch module verbatim)."""
    if k == 0:
        return ((t[i] <= x) & (x < t[i + 1])).astype(x.dtype)
    denom1 = t[i + k] - t[i]
    denom2 = t[i + k + 1] - t[i + 1]
    term1 = 0.0
    if denom1 != 0:
        term1 = (x - t[i]) / denom1 * _basis_recursive(x, i, k - 1, t)
    term2 = 0.0
    if denom2 != 0:
        term2 = (t[i + k + 1] - x) / denom2 * _basis_recursive(x, i + 1, k - 1, t)
    return term1 + term2


def reference_forward(x, control_p, bias, *, degree=DEGREE, num_knots=NUM_KNOTS):
    knots = make_knots(degree, num_knots)
    basises = []
    for f in range(x.shape[1]):
        cols = [_basis_recursive(x[:, f], i, degree, knots)
                for i in range(num_knots)]
        basises.append(jnp.stack(cols, axis=-1))          # (batch, K)
    B = jnp.stack(basises)                                # (F, batch, K)
    tout = jnp.transpose(B, (1, 2, 0)) * control_p        # (batch, K, F)
    return tout.sum(axis=1) + bias                        # (batch, F)


if __name__ == "__main__":
    key = jax.random.PRNGKey(0)
    kx, kc, kb = jax.random.split(key, 3)

    # inputs in [0, 1) where the open-uniform spline basis is supported
    x = jax.random.uniform(kx, (BATCH, INPUT_DIM), dtype=jnp.float32)
    # deterministic "randn" parameters (shapes from __init__, input_dim != 2 branch)
    control_p = jax.random.normal(kc, (NUM_KNOTS, NUM_NEURONS), dtype=jnp.float32)
    bias = jax.random.normal(kb, (NUM_NEURONS,), dtype=jnp.float32)

    out = prod_bspline_forward(x, control_p, bias)
    out = jax.block_until_ready(out)

    ref = reference_forward(x, control_p, bias)
    np.testing.assert_allclose(np.asarray(out), np.asarray(ref),
                               rtol=1e-4, atol=1e-4)
    print("KERNEL_OK")
</pallas_src>

<mosaic_0001>
module attributes {stable_mosaic.version = 11 : i64} {
  func.func @spline_kernel(%arg0: i32, %arg1: memref<8x128xf32, #tpu.memory_space<vmem>>, %arg2: memref<8x128xf32, #tpu.memory_space<vmem>>, %arg3: memref<1x128xf32, #tpu.memory_space<vmem>>, %arg4: memref<8x128xf32, #tpu.memory_space<vmem>>) attributes {dimension_semantics = [#tpu.dimension_semantics<parallel>], iteration_bounds = array<i64: 1>, scalar_prefetch = 0 : i64, scratch_operands = 0 : i64, tpu.core_type = #tpu.core_type<tc>, window_params = [{transform_indices = @transform_0, window_bounds = array<i64: 8, 128>}, {pipeline_mode = #tpu.pipeline_mode<synchronous>, transform_indices = @transform_1, window_bounds = array<i64: 8, 128>}, {pipeline_mode = #tpu.pipeline_mode<synchronous>, transform_indices = @transform_2, window_bounds = array<i64: 1, 128>}, {transform_indices = @transform_3, window_bounds = array<i64: 8, 128>}]} {
    %c0 = arith.constant 0 : index
    %c0_0 = arith.constant 0 : index
    %0 = vector.load %arg1[%c0, %c0_0] : memref<8x128xf32, #tpu.memory_space<vmem>>, vector<8x128xf32>
    %c0_1 = arith.constant 0 : index
    %c0_2 = arith.constant 0 : index
    %1 = vector.load %arg2[%c0_1, %c0_2] : memref<8x128xf32, #tpu.memory_space<vmem>>, vector<8x128xf32>
    %c0_3 = arith.constant 0 : index
    %c0_4 = arith.constant 0 : index
    %2 = vector.load %arg3[%c0_3, %c0_4] : memref<1x128xf32, #tpu.memory_space<vmem>>, vector<1x128xf32>
    %cst = arith.constant 0.000000e+00 : f32
    %3 = vector.broadcast %cst : f32 to vector<8x128xf32>
    %4 = arith.cmpf oge, %0, %3 : vector<8x128xf32>
    %5 = arith.extui %4 : vector<8x128xi1> to vector<8x128xi32>
    %6 = arith.sitofp %5 : vector<8x128xi32> to vector<8x128xf32>
    %cst_5 = arith.constant 2.000000e-01 : f32
    %7 = vector.broadcast %cst_5 : f32 to vector<8x128xf32>
    %8 = arith.cmpf oge, %0, %7 : vector<8x128xf32>
    %9 = arith.extui %8 : vector<8x128xi1> to vector<8x128xi32>
    %10 = arith.sitofp %9 : vector<8x128xi32> to vector<8x128xf32>
    %11 = arith.subf %6, %10 : vector<8x128xf32>
    %cst_6 = arith.constant 4.000000e-01 : f32
    %12 = vector.broadcast %cst_6 : f32 to vector<8x128xf32>
    %13 = arith.cmpf oge, %0, %12 : vector<8x128xf32>
    %14 = arith.extui %13 : vector<8x128xi1> to vector<8x128xi32>
    %15 = arith.sitofp %14 : vector<8x128xi32> to vector<8x128xf32>
    %16 = arith.subf %10, %15 : vector<8x128xf32>
    %cst_7 = arith.constant 6.000000e-01 : f32
    %17 = vector.broadcast %cst_7 : f32 to vector<8x128xf32>
    %18 = arith.cmpf oge, %0, %17 : vector<8x128xf32>
    %19 = arith.extui %18 : vector<8x128xi1> to vector<8x128xi32>
    %20 = arith.sitofp %19 : vector<8x128xi32> to vector<8x128xf32>
    %21 = arith.subf %15, %20 : vector<8x128xf32>
    %cst_8 = arith.constant 8.000000e-01 : f32
    %22 = vector.broadcast %cst_8 : f32 to vector<8x128xf32>
    %23 = arith.cmpf oge, %0, %22 : vector<8x128xf32>
    %24 = arith.extui %23 : vector<8x128xi1> to vector<8x128xi32>
    %25 = arith.sitofp %24 : vector<8x128xi32> to vector<8x128xf32>
    %26 = arith.subf %20, %25 : vector<8x128xf32>
    %cst_9 = arith.constant 1.000000e+00 : f32
    %27 = vector.broadcast %cst_9 : f32 to vector<8x128xf32>
    %28 = arith.cmpf oge, %0, %27 : vector<8x128xf32>
    %29 = arith.extui %28 : vector<8x128xi1> to vector<8x128xi32>
    %30 = arith.sitofp %29 : vector<8x128xi32> to vector<8x128xf32>
    %31 = arith.subf %25, %30 : vector<8x128xf32>
    %cst_10 = arith.constant 5.000000e+00 : f32
    %32 = vector.broadcast %cst_10 : f32 to vector<8x128xf32>
    %33 = arith.mulf %0, %32 : vector<8x128xf32>
    %cst_11 = arith.constant 1.000000e+00 : f32
    %34 = vector.broadcast %cst_11 : f32 to vector<8x128xf32>
    %35 = arith.subf %34, %33 : vector<8x128xf32>
    %36 = arith.mulf %35, %11 : vector<8x128xf32>
    %37 = arith.mulf %33, %11 : vector<8x128xf32>
    %cst_12 = arith.constant 2.000000e-01 : f32
    %38 = vector.broadcast %cst_12 : f32 to vector<8x128xf32>
    %39 = arith.subf %0, %38 : vector<8x128xf32>
    %cst_13 = arith.constant 5.000000e+00 : f32
    %40 = vector.broadcast %cst_13 : f32 to vector<8x128xf32>
    %41 = arith.mulf %39, %40 : vector<8x128xf32>
    %cst_14 = arith.constant 1.000000e+00 : f32
    %42 = vector.broadcast %cst_14 : f32 to vector<8x128xf32>
    %43 = arith.subf %42, %41 : vector<8x128xf32>
    %44 = arith.mulf %43, %16 : vector<8x128xf32>
    %45 = arith.addf %37, %44 : vector<8x128xf32>
    %46 = arith.mulf %41, %16 : vector<8x128xf32>
    %cst_15 = arith.constant 4.000000e-01 : f32
    %47 = vector.broadcast %cst_15 : f32 to vector<8x128xf32>
    %48 = arith.subf %0, %47 : vector<8x128xf32>
    %cst_16 = arith.constant 4.99999952 : f32
    %49 = vector.broadcast %cst_16 : f32 to vector<8x128xf32>
    %50 = arith.mulf %48, %49 : vector<8x128xf32>
    %cst_17 = arith.constant 1.000000e+00 : f32
    %51 = vector.broadcast %cst_17 : f32 to vector<8x128xf32>
    %52 = arith.subf %51, %50 : vector<8x128xf32>
    %53 = arith.mulf %52, %21 : vector<8x128xf32>
    %54 = arith.addf %46, %53 : vector<8x128xf32>
    %55 = arith.mulf %50, %21 : vector<8x128xf32>
    %cst_18 = arith.constant 6.000000e-01 : f32
    %56 = vector.broadcast %cst_18 : f32 to vector<8x128xf32>
    %57 = arith.subf %0, %56 : vector<8x128xf32>
    %cst_19 = arith.constant 5.00000048 : f32
    %58 = vector.broadcast %cst_19 : f32 to vector<8x128xf32>
    %59 = arith.mulf %57, %58 : vector<8x128xf32>
    %cst_20 = arith.constant 1.000000e+00 : f32
    %60 = vector.broadcast %cst_20 : f32 to vector<8x128xf32>
    %61 = arith.subf %60, %59 : vector<8x128xf32>
    %62 = arith.mulf %61, %26 : vector<8x128xf32>
    %63 = arith.addf %55, %62 : vector<8x128xf32>
    %64 = arith.mulf %59, %26 : vector<8x128xf32>
    %cst_21 = arith.constant 8.000000e-01 : f32
    %65 = vector.broadcast %cst_21 : f32 to vector<8x128xf32>
    %66 = arith.subf %0, %65 : vector<8x128xf32>
    %cst_22 = arith.constant 5.00000048 : f32
    %67 = vector.broadcast %cst_22 : f32 to vector<8x128xf32>
    %68 = arith.mulf %66, %67 : vector<8x128xf32>
    %cst_23 = arith.constant 1.000000e+00 : f32
    %69 = vector.broadcast %cst_23 : f32 to vector<8x128xf32>
    %70 = arith.subf %69, %68 : vector<8x128xf32>
    %71 = arith.mulf %70, %31 : vector<8x128xf32>
    %72 = arith.addf %64, %71 : vector<8x128xf32>
    %73 = arith.mulf %68, %31 : vector<8x128xf32>
    %cst_24 = arith.constant 5.000000e+00 : f32
    %74 = vector.broadcast %cst_24 : f32 to vector<8x128xf32>
    %75 = arith.mulf %0, %74 : vector<8x128xf32>
    %cst_25 = arith.constant 1.000000e+00 : f32
    %76 = vector.broadcast %cst_25 : f32 to vector<8x128xf32>
    %77 = arith.subf %76, %75 : vector<8x128xf32>
    %78 = arith.mulf %77, %36 : vector<8x128xf32>
    %79 = arith.mulf %75, %36 : vector<8x128xf32>
    %cst_26 = arith.constant 2.500000e+00 : f32
    %80 = vector.broadcast %cst_26 : f32 to vector<8x128xf32>
    %81 = arith.mulf %0, %80 : vector<8x128xf32>
    %cst_27 = arith.constant 1.000000e+00 : f32
    %82 = vector.broadcast %cst_27 : f32 to vector<8x128xf32>
    %83 = arith.subf %82, %81 : vector<8x128xf32>
    %84 = arith.mulf %83, %45 : vector<8x128xf32>
    %85 = arith.addf %79, %84 : vector<8x128xf32>
    %86 = arith.mulf %81, %45 : vector<8x128xf32>
    %cst_28 = arith.constant 2.000000e-01 : f32
    %87 = vector.broadcast %cst_28 : f32 to vector<8x128xf32>
    %88 = arith.subf %0, %87 : vector<8x128xf32>
    %cst_29 = arith.constant 2.49999976 : f32
    %89 = vector.broadcast %cst_29 : f32 to vector<8x128xf32>
    %90 = arith.mulf %88, %89 : vector<8x128xf32>
    %cst_30 = arith.constant 1.000000e+00 : f32
    %91 = vector.broadcast %cst_30 : f32 to vector<8x128xf32>
    %92 = arith.subf %91, %90 : vector<8x128xf32>
    %93 = arith.mulf %92, %54 : vector<8x128xf32>
    %94 = arith.addf %86, %93 : vector<8x128xf32>
    %95 = arith.mulf %90, %54 : vector<8x128xf32>
    %cst_31 = arith.constant 4.000000e-01 : f32
    %96 = vector.broadcast %cst_31 : f32 to vector<8x128xf32>
    %97 = arith.subf %0, %96 : vector<8x128xf32>
    %cst_32 = arith.constant 2.500000e+00 : f32
    %98 = vector.broadcast %cst_32 : f32 to vector<8x128xf32>
    %99 = arith.mulf %97, %98 : vector<8x128xf32>
    %cst_33 = arith.constant 1.000000e+00 : f32
    %100 = vector.broadcast %cst_33 : f32 to vector<8x128xf32>
    %101 = arith.subf %100, %99 : vector<8x128xf32>
    %102 = arith.mulf %101, %63 : vector<8x128xf32>
    %103 = arith.addf %95, %102 : vector<8x128xf32>
    %104 = arith.mulf %99, %63 : vector<8x128xf32>
    %cst_34 = arith.constant 6.000000e-01 : f32
    %105 = vector.broadcast %cst_34 : f32 to vector<8x128xf32>
    %106 = arith.subf %0, %105 : vector<8x128xf32>
    %cst_35 = arith.constant 2.50000024 : f32
    %107 = vector.broadcast %cst_35 : f32 to vector<8x128xf32>
    %108 = arith.mulf %106, %107 : vector<8x128xf32>
    %cst_36 = arith.constant 1.000000e+00 : f32
    %109 = vector.broadcast %cst_36 : f32 to vector<8x128xf32>
    %110 = arith.subf %109, %108 : vector<8x128xf32>
    %111 = arith.mulf %110, %72 : vector<8x128xf32>
    %112 = arith.addf %104, %111 : vector<8x128xf32>
    %113 = arith.mulf %108, %72 : vector<8x128xf32>
    %cst_37 = arith.constant 8.000000e-01 : f32
    %114 = vector.broadcast %cst_37 : f32 to vector<8x128xf32>
    %115 = arith.subf %0, %114 : vector<8x128xf32>
    %cst_38 = arith.constant 5.00000048 : f32
    %116 = vector.broadcast %cst_38 : f32 to vector<8x128xf32>
    %117 = arith.mulf %115, %116 : vector<8x128xf32>
    %cst_39 = arith.constant 1.000000e+00 : f32
    %118 = vector.broadcast %cst_39 : f32 to vector<8x128xf32>
    %119 = arith.subf %118, %117 : vector<8x128xf32>
    %120 = arith.mulf %119, %73 : vector<8x128xf32>
    %121 = arith.addf %113, %120 : vector<8x128xf32>
    %122 = arith.mulf %117, %73 : vector<8x128xf32>
    %cst_40 = arith.constant 5.000000e+00 : f32
    %123 = vector.broadcast %cst_40 : f32 to vector<8x128xf32>
    %124 = arith.mulf %0, %123 : vector<8x128xf32>
    %125 = vector.extract_strided_slice %1 {offsets = [1, 0], sizes = [1, 128], strides = [1, 1]} : vector<8x128xf32> to vector<1x128xf32>
    %126 = vector.extract_strided_slice %1 {offsets = [0, 0], sizes = [1, 128], strides = [1, 1]} : vector<8x128xf32> to vector<1x128xf32>
    %127 = arith.subf %125, %126 : vector<1x128xf32>
    %128 = vector.broadcast %127 : vector<1x128xf32> to vector<8x128xf32>
    %129 = arith.mulf %128, %124 : vector<8x128xf32>
    %130 = vector.broadcast %126 : vector<1x128xf32> to vector<8x128xf32>
    %131 = arith.addf %130, %129 : vector<8x128xf32>
    %132 = arith.mulf %131, %78 : vector<8x128xf32>
    %cst_41 = arith.constant 2.500000e+00 : f32
    %133 = vector.broadcast %cst_41 : f32 to vector<8x128xf32>
    %134 = arith.mulf %0, %133 : vector<8x128xf32>
    %135 = vector.extract_strided_slice %1 {offsets = [2, 0], sizes = [1, 128], strides = [1, 1]} : vector<8x128xf32> to vector<1x128xf32>
    %136 = vector.extract_strided_slice %1 {offsets = [1, 0], sizes = [1, 128], strides = [1, 1]} : vector<8x128xf32> to vector<1x128xf32>
    %137 = arith.subf %135, %136 : vector<1x128xf32>
    %138 = vector.broadcast %137 : vector<1x128xf32> to vector<8x128xf32>
    %139 = arith.mulf %138, %134 : vector<8x128xf32>
    %140 = vector.broadcast %136 : vector<1x128xf32> to vector<8x128xf32>
    %141 = arith.addf %140, %139 : vector<8x128xf32>
    %142 = arith.mulf %141, %85 : vector<8x128xf32>
    %143 = arith.addf %132, %142 : vector<8x128xf32>
    %cst_42 = arith.constant 1.66666663 : f32
    %144 = vector.broadcast %cst_42 : f32 to vector<8x128xf32>
    %145 = arith.mulf %0, %144 : vector<8x128xf32>
    %146 = vector.extract_strided_slice %1 {offsets = [3, 0], sizes = [1, 128], strides = [1, 1]} : vector<8x128xf32> to vector<1x128xf32>
    %147 = vector.extract_strided_slice %1 {offsets = [2, 0], sizes = [1, 128], strides = [1, 1]} : vector<8x128xf32> to vector<1x128xf32>
    %148 = arith.subf %146, %147 : vector<1x128xf32>
    %149 = vector.broadcast %148 : vector<1x128xf32> to vector<8x128xf32>
    %150 = arith.mulf %149, %145 : vector<8x128xf32>
    %151 = vector.broadcast %147 : vector<1x128xf32> to vector<8x128xf32>
    %152 = arith.addf %151, %150 : vector<8x128xf32>
    %153 = arith.mulf %152, %94 : vector<8x128xf32>
    %154 = arith.addf %143, %153 : vector<8x128xf32>
    %cst_43 = arith.constant 2.000000e-01 : f32
    %155 = vector.broadcast %cst_43 : f32 to vector<8x128xf32>
    %156 = arith.subf %0, %155 : vector<8x128xf32>
    %cst_44 = arith.constant 1.66666663 : f32
    %157 = vector.broadcast %cst_44 : f32 to vector<8x128xf32>
    %158 = arith.mulf %156, %157 : vector<8x128xf32>
    %159 = vector.extract_strided_slice %1 {offsets = [4, 0], sizes = [1, 128], strides = [1, 1]} : vector<8x128xf32> to vector<1x128xf32>
    %160 = vector.extract_strided_slice %1 {offsets = [3, 0], sizes = [1, 128], strides = [1, 1]} : vector<8x128xf32> to vector<1x128xf32>
    %161 = arith.subf %159, %160 : vector<1x128xf32>
    %162 = vector.broadcast %161 : vector<1x128xf32> to vector<8x128xf32>
    %163 = arith.mulf %162, %158 : vector<8x128xf32>
    %164 = vector.broadcast %160 : vector<1x128xf32> to vector<8x128xf32>
    %165 = arith.addf %164, %163 : vector<8x128xf32>
    %166 = arith.mulf %165, %103 : vector<8x128xf32>
    %167 = arith.addf %154, %166 : vector<8x128xf32>
    %cst_45 = arith.constant 4.000000e-01 : f32
    %168 = vector.broadcast %cst_45 : f32 to vector<8x128xf32>
    %169 = arith.subf %0, %168 : vector<8x128xf32>
    %cst_46 = arith.constant 1.66666663 : f32
    %170 = vector.broadcast %cst_46 : f32 to vector<8x128xf32>
    %171 = arith.mulf %169, %170 : vector<8x128xf32>
    %172 = vector.extract_strided_slice %1 {offsets = [5, 0], sizes = [1, 128], strides = [1, 1]} : vector<8x128xf32> to vector<1x128xf32>
    %173 = vector.extract_strided_slice %1 {offsets = [4, 0], sizes = [1, 128], strides = [1, 1]} : vector<8x128xf32> to vector<1x128xf32>
    %174 = arith.subf %172, %173 : vector<1x128xf32>
    %175 = vector.broadcast %174 : vector<1x128xf32> to vector<8x128xf32>
    %176 = arith.mulf %175, %171 : vector<8x128xf32>
    %177 = vector.broadcast %173 : vector<1x128xf32> to vector<8x128xf32>
    %178 = arith.addf %177, %176 : vector<8x128xf32>
    %179 = arith.mulf %178, %112 : vector<8x128xf32>
    %180 = arith.addf %167, %179 : vector<8x128xf32>
    %cst_47 = arith.constant 6.000000e-01 : f32
    %181 = vector.broadcast %cst_47 : f32 to vector<8x128xf32>
    %182 = arith.subf %0, %181 : vector<8x128xf32>
    %cst_48 = arith.constant 2.50000024 : f32
    %183 = vector.broadcast %cst_48 : f32 to vector<8x128xf32>
    %184 = arith.mulf %182, %183 : vector<8x128xf32>
    %185 = vector.extract_strided_slice %1 {offsets = [6, 0], sizes = [1, 128], strides = [1, 1]} : vector<8x128xf32> to vector<1x128xf32>
    %186 = vector.extract_strided_slice %1 {offsets = [5, 0], sizes = [1, 128], strides = [1, 1]} : vector<8x128xf32> to vector<1x128xf32>
    %187 = arith.subf %185, %186 : vector<1x128xf32>
    %188 = vector.broadcast %187 : vector<1x128xf32> to vector<8x128xf32>
    %189 = arith.mulf %188, %184 : vector<8x128xf32>
    %190 = vector.broadcast %186 : vector<1x128xf32> to vector<8x128xf32>
    %191 = arith.addf %190, %189 : vector<8x128xf32>
    %192 = arith.mulf %191, %121 : vector<8x128xf32>
    %193 = arith.addf %180, %192 : vector<8x128xf32>
    %cst_49 = arith.constant 8.000000e-01 : f32
    %194 = vector.broadcast %cst_49 : f32 to vector<8x128xf32>
    %195 = arith.subf %0, %194 : vector<8x128xf32>
    %cst_50 = arith.constant 5.00000048 : f32
    %196 = vector.broadcast %cst_50 : f32 to vector<8x128xf32>
    %197 = arith.mulf %195, %196 : vector<8x128xf32>
    %198 = vector.extract_strided_slice %1 {offsets = [7, 0], sizes = [1, 128], strides = [1, 1]} : vector<8x128xf32> to vector<1x128xf32>
    %199 = vector.extract_strided_slice %1 {offsets = [6, 0], sizes = [1, 128], strides = [1, 1]} : vector<8x128xf32> to vector<1x128xf32>
    %200 = arith.subf %198, %199 : vector<1x128xf32>
    %201 = vector.broadcast %200 : vector<1x128xf32> to vector<8x128xf32>
    %202 = arith.mulf %201, %197 : vector<8x128xf32>
    %203 = vector.broadcast %199 : vector<1x128xf32> to vector<8x128xf32>
    %204 = arith.addf %203, %202 : vector<8x128xf32>
    %205 = arith.mulf %204, %122 : vector<8x128xf32>
    %206 = arith.addf %193, %205 : vector<8x128xf32>
    %207 = vector.broadcast %2 : vector<1x128xf32> to vector<8x128xf32>
    %208 = arith.addf %206, %207 : vector<8x128xf32>
    %c0_51 = arith.constant 0 : index
    %c0_52 = arith.constant 0 : index
    %209 = vector.load %arg4[%c0_51, %c0_52] : memref<8x128xf32, #tpu.memory_space<vmem>>, vector<8x128xf32>
    tpu.vector_store %arg4[%c0_51, %c0_52], %208 {strides = array<i32>} : memref<8x128xf32, #tpu.memory_space<vmem>>, vector<8x128xf32>,
    return
  }
  func.func @transform_0(%arg0: i32) -> (i32, i32) {
    %c0_i32 = arith.constant 0 : i32
    %c0_i32_0 = arith.constant 0 : i32
    return %arg0, %c0_i32 : i32, i32
  }
  func.func @transform_1(%arg0: i32) -> (i32, i32) {
    %c0_i32 = arith.constant 0 : i32
    %c0_i32_0 = arith.constant 0 : i32
    %c0_i32_1 = arith.constant 0 : i32
    return %c0_i32, %c0_i32_0 : i32, i32
  }
  func.func @transform_2(%arg0: i32) -> (i32, i32) {
    %c0_i32 = arith.constant 0 : i32
    %c0_i32_0 = arith.constant 0 : i32
    %c0_i32_1 = arith.constant 0 : i32
    return %c0_i32, %c0_i32_0 : i32, i32
  }
  func.func @transform_3(%arg0: i32) -> (i32, i32) {
    %c0_i32 = arith.constant 0 : i32
    %c0_i32_0 = arith.constant 0 : i32
    return %arg0, %c0_i32 : i32, i32
  }
}

</mosaic_0001>

<llo_original>
// kernel: tpu_custom_call.1
$region0: #{tpu_custom_call.1}
  #allocation0 [shape = 'u32[]', space=smem, size = 0x4, offset = 0x4, fixed_abs, tag = 'smem constant byte address 0x4 - core index']
  #allocation1 [shape = 'u32[144,128]{1,0:T(1,128)}', space=vmem, size = 0x12000, scoped, tag = 'internal scratch']
  %s0 = inlined_call_operand.hbm [shape: f32[8,128], index: 0, kind: input, shape index: {}]
  %s1 = inlined_call_operand.hbm [shape: f32[8,128], index: 1, kind: input, shape index: {}]
  %s2 = inlined_call_operand.vmem [shape: f32[1,128], index: 2, kind: input, shape index: {}]
  %s3 = inlined_call_operand.hbm [shape: f32[8,128], index: 3, kind: output, shape index: {}]
  %s4 = sld [smem:[#allocation0]]
  $region30: #{tpu_custom_call.1} parent=0
    _
  %s6 = ssub.s32 1, %s4
  %s7 = scalar_select 0, %s6, %s4
  $region1: #{tpu_custom_call.1} parent=0
    #allocation2 [shape = 'u8[4096]{0}', space=vmem, size = 0x1000, scoped, tag = 'input window, operand 0, single buffered']
    #allocation3 [shape = 's32[1]{0}', space=sflag, size = 0x4, scoped, tag = 'scoped memory for tpu_custom_call.1']
    #allocation4 [shape = 's32[1]{0}', space=sflag, size = 0x4, scoped, tag = 'scoped memory for tpu_custom_call.1']
    #allocation5 [shape = 'u8[4096]{0}', space=vmem, size = 0x1000, scoped, tag = 'input window, operand 1, single buffered']
    #allocation6 [shape = 's32[1]{0}', space=sflag, size = 0x4, scoped, tag = 'scoped memory for tpu_custom_call.1']
    #allocation7 [shape = 'u8[4096]{0}', space=vmem, size = 0x1000, scoped, tag = 'output window, operand 0, single buffered']
    %8 = vsyncpa [#allocation3], 0
    %9 = vsyncpa [#allocation6], 0
    %10 = vsyncpa [#allocation4], 0
    // Predicated region
    $region2: #{tpu_custom_call.1} parent=1 // pred_check
      _
    $region3: #{tpu_custom_call.1} parent=1 // pred_check_branch
      %12 = sbr.rel (0) target = $region5
    $region4: #{tpu_custom_call.1} parent=1 // pred_region
      %s14 = ssub.s32 128, 128
      %15 = vsyncadd [#allocation3], %s14
      %s17 = sshll.u32 [#allocation2], 4
      %s18 = int_to_ptr.vmem [resolvable:$true] %s17
      %20 = dma.hbm_to_vmem [thread:$0]  %s0, 128, %s18, [#allocation3]
    $region5: #{tpu_custom_call.1} parent=1 // pred_fallthru
      _
    // Predicated region
    $region6: #{tpu_custom_call.1} parent=1 // pred_check
      _
    $region7: #{tpu_custom_call.1} parent=1 // pred_check_branch
      %22 = sbr.rel (0) target = $region9
    $region8: #{tpu_custom_call.1} parent=1 // pred_region
      %s24 = ssub.s32 128, 128
      %25 = vsyncadd [#allocation6], %s24
      %s27 = sshll.u32 [#allocation5], 4
      %s28 = int_to_ptr.vmem [resolvable:$true] %s27
      %30 = dma.hbm_to_vmem [thread:$0]  %s1, 128, %s28, [#allocation6]
    $region9: #{tpu_custom_call.1} parent=1 // pred_fallthru
      _
    // Predicated region
    $region10: #{tpu_custom_call.1} parent=1 // pred_check
      _
    $region11: #{tpu_custom_call.1} parent=1 // pred_check_branch
      %32 = sbr.rel (0) target = $region13
    $region12: #{tpu_custom_call.1} parent=1 // pred_region
      _
    $region13: #{tpu_custom_call.1} parent=1 // pred_fallthru
      _
    // Predicated region
    $region14: #{tpu_custom_call.1} parent=1 // pred_check
      _
    $region15: #{tpu_custom_call.1} parent=1 // pred_check_branch
      %34 = sbr.rel (0) target = $region17
    $region16: #{tpu_custom_call.1} parent=1 // pred_region
      %35 = dma.done [#allocation3], 128
    $region17: #{tpu_custom_call.1} parent=1 // pred_fallthru
      _
    // Predicated region
    $region18: #{tpu_custom_call.1} parent=1 // pred_check
      _
    $region19: #{tpu_custom_call.1} parent=1 // pred_check_branch
      %37 = sbr.rel (0) target = $region21
    $region20: #{tpu_custom_call.1} parent=1 // pred_region
      %38 = dma.done [#allocation6], 128
    $region21: #{tpu_custom_call.1} parent=1 // pred_fallthru
      _
    %v39 = vld [vmem:[#allocation2] sm:$0xff]
    %v40 = vld [vmem:[#allocation5] sm:$0xff]
    %v41 = vld [vmem:[%s2] sm:$0x1]
    %vm42 = vcmp.ge.f32.partialorder %v39, 0.0
    %v43 = vsel %vm42, 1, 0
    %v44 = vcvt.s32.f32 %v43
    %vm45 = vcmp.ge.f32.partialorder %v39, 0.2
    %v46 = vsel %vm45, 1, 0
    %v47 = vcvt.s32.f32 %v46
    %v48 = vsub.f32 %v44, %v47
    %vm49 = vcmp.ge.f32.partialorder %v39, 0.4
    %v50 = vsel %vm49, 1, 0
    %v51 = vcvt.s32.f32 %v50
    %v52 = vsub.f32 %v47, %v51
    %vm53 = vcmp.ge.f32.partialorder %v39, 0.6
    %v54 = vsel %vm53, 1, 0
    %v55 = vcvt.s32.f32 %v54
    %v56 = vsub.f32 %v51, %v55
    %vm57 = vcmp.ge.f32.partialorder %v39, 0.8
    %v58 = vsel %vm57, 1, 0
    %v59 = vcvt.s32.f32 %v58
    %v60 = vsub.f32 %v55, %v59
    %vm61 = vcmp.ge.f32.partialorder %v39, 1.0
    %v62 = vsel %vm61, 1, 0
    %v63 = vcvt.s32.f32 %v62
    %v64 = vsub.f32 %v59, %v63
    %v65 = vmul.f32 %v39, 5.0
    %v66 = vsub.f32 1.0, %v65
    %v67 = vmul.f32 %v66, %v48
    %v68 = vmul.f32 %v65, %v48
    %v69 = vsub.f32 %v39, 0.2
    %v70 = vmul.f32 %v69, 5.0
    %v71 = vsub.f32 1.0, %v70
    %v72 = vmul.f32 %v71, %v52
    %v73 = vadd.f32 %v68, %v72
    %v74 = vmul.f32 %v70, %v52
    %v75 = vsub.f32 %v39, 0.4
    %v76 = vmul.f32 %v75, 4.9999995
    %v77 = vsub.f32 1.0, %v76
    %v78 = vmul.f32 %v77, %v56
    %v79 = vadd.f32 %v74, %v78
    %v80 = vmul.f32 %v76, %v56
    %v81 = vsub.f32 %v39, 0.6
    %v82 = vmul.f32 %v81, 5.0000005
    %v83 = vsub.f32 1.0, %v82
    %v84 = vmul.f32 %v83, %v60
    %v85 = vadd.f32 %v80, %v84
    %v86 = vmul.f32 %v82, %v60
    %v87 = vsub.f32 %v39, 0.8
    %v88 = vmul.f32 %v87, 5.0000005
    %v89 = vsub.f32 1.0, %v88
    %v90 = vmul.f32 %v89, %v64
    %v91 = vadd.f32 %v86, %v90
    %v92 = vmul.f32 %v88, %v64
    %v93 = vmul.f32 %v66, %v67
    %v94 = vmul.f32 %v65, %v67
    %v95 = vmul.f32 %v39, 2.5
    %v96 = vsub.f32 1.0, %v95
    %v97 = vmul.f32 %v96, %v73
    %v98 = vadd.f32 %v94, %v97
    %v99 = vmul.f32 %v95, %v73
    %v100 = vmul.f32 %v69, 2.4999998
    %v101 = vsub.f32 1.0, %v100
    %v102 = vmul.f32 %v101, %v79
    %v103 = vadd.f32 %v99, %v102
    %v104 = vmul.f32 %v100, %v79
    %v105 = vmul.f32 %v75, 2.5
    %v106 = vsub.f32 1.0, %v105
    %v107 = vmul.f32 %v106, %v85
    %v108 = vadd.f32 %v104, %v107
    %v109 = vmul.f32 %v105, %v85
    %v110 = vmul.f32 %v81, 2.5000002
    %v111 = vsub.f32 1.0, %v110
    %v112 = vmul.f32 %v111, %v91
    %v113 = vadd.f32 %v109, %v112
    %v114 = vmul.f32 %v110, %v91
    %v115 = vmul.f32 %v89, %v92
    %v116 = vadd.f32 %v114, %v115
    %v117 = vmul.f32 %v88, %v92
    %v119 = vrot.slane %v40, 7
    %v121 = vsub.f32 %v40, %v119
    %v122 = vlaneseq
    %v123 = vshrl.u32 %v122, 7
    %v124 = vsub.s32 1, %v123
    %v125 = vrot.slane %v121, %v124
    %v126 = vmul.f32 %v125, %v65
    %v127 = vlaneseq
    %v128 = vshrl.u32 %v127, 7
    %v129 = vsub.s32 0, %v128
    %v130 = vrot.slane %v40, %v129
    %v131 = vadd.f32 %v130, %v126
    %v132 = vmul.f32 %v131, %v93
    %v133 = vlaneseq
    %v134 = vshrl.u32 %v133, 7
    %v135 = vsub.s32 2, %v134
    %v136 = vrot.slane %v121, %v135
    %v137 = vmul.f32 %v136, %v95
    %v138 = vlaneseq
    %v139 = vshrl.u32 %v138, 7
    %v140 = vsub.s32 1, %v139
    %v141 = vrot.slane %v40, %v140
    %v142 = vadd.f32 %v141, %v137
    %v143 = vmul.f32 %v142, %v98
    %v144 = vadd.f32 %v132, %v143
    %v145 = vmul.f32 %v39, 1.6666666
    %v146 = vlaneseq
    %v147 = vshrl.u32 %v146, 7
    %v148 = vsub.s32 3, %v147
    %v149 = vrot.slane %v121, %v148
    %v150 = vmul.f32 %v149, %v145
    %v151 = vlaneseq
    %v152 = vshrl.u32 %v151, 7
    %v153 = vsub.s32 2, %v152
    %v154 = vrot.slane %v40, %v153
    %v155 = vadd.f32 %v154, %v150
    %v156 = vmul.f32 %v155, %v103
    %v157 = vadd.f32 %v144, %v156
    %v158 = vmul.f32 %v69, 1.6666666
    %v159 = vlaneseq
    %v160 = vshrl.u32 %v159, 7
    %v161 = vsub.s32 4, %v160
    %v162 = vrot.slane %v121, %v161
    %v163 = vmul.f32 %v162, %v158
    %v164 = vlaneseq
    %v165 = vshrl.u32 %v164, 7
    %v166 = vsub.s32 3, %v165
    %v167 = vrot.slane %v40, %v166
    %v168 = vadd.f32 %v167, %v163
    %v169 = vmul.f32 %v168, %v108
    %v170 = vadd.f32 %v157, %v169
    %v171 = vmul.f32 %v75, 1.6666666
    %v172 = vlaneseq
    %v173 = vshrl.u32 %v172, 7
    %v174 = vsub.s32 5, %v173
    %v175 = vrot.slane %v121, %v174
    %v176 = vmul.f32 %v175, %v171
    %v177 = vlaneseq
    %v178 = vshrl.u32 %v177, 7
    %v179 = vsub.s32 4, %v178
    %v180 = vrot.slane %v40, %v179
    %v181 = vadd.f32 %v180, %v176
    %v182 = vmul.f32 %v181, %v113
    %v183 = vadd.f32 %v170, %v182
    %v184 = vlaneseq
    %v185 = vshrl.u32 %v184, 7
    %v186 = vsub.s32 6, %v185
    %v187 = vrot.slane %v121, %v186
    %v188 = vmul.f32 %v187, %v110
    %v189 = vlaneseq
    %v190 = vshrl.u32 %v189, 7
    %v191 = vsub.s32 5, %v190
    %v192 = vrot.slane %v40, %v191
    %v193 = vadd.f32 %v192, %v188
    %v194 = vmul.f32 %v193, %v116
    %v195 = vadd.f32 %v183, %v194
    %v196 = vlaneseq
    %v197 = vshrl.u32 %v196, 7
    %v198 = vsub.s32 7, %v197
    %v199 = vrot.slane %v121, %v198
    %v200 = vmul.f32 %v199, %v88
    %v201 = vlaneseq
    %v202 = vshrl.u32 %v201, 7
    %v203 = vsub.s32 6, %v202
    %v204 = vrot.slane %v40, %v203
    %v205 = vadd.f32 %v204, %v200
    %v206 = vmul.f32 %v205, %v117
    %v207 = vadd.f32 %v195, %v206
    %v209 = vlaneseq
    %v210 = vshrl.u32 %v209, 7
    %v211 = vsub.s32 0, %v210
    %v212 = vrot.slane %v41, %v211
    %v214 = vadd.f32 %v207, %v212
    %215 = vst [vmem:[#allocation7] sm:$0xff] %v214
    // Predicated region
    $region22: #{tpu_custom_call.1} parent=1 // pred_check
      _
    $region23: #{tpu_custom_call.1} parent=1 // pred_check_branch
      %217 = sbr.rel (0) target = $region25
    $region24: #{tpu_custom_call.1} parent=1 // pred_region
      %s219 = ssub.s32 128, 128
      %220 = vsyncadd [#allocation4], %s219
      %s222 = sshll.u32 [#allocation7], 4
      %s223 = int_to_ptr.vmem [resolvable:$true] %s222
      %225 = dma.vmem_to_hbm [thread:$0]  %s223, 128, %s3, [#allocation4]
    $region25: #{tpu_custom_call.1} parent=1 // pred_fallthru
      _
    // Predicated region
    $region26: #{tpu_custom_call.1} parent=1 // pred_check
      _
    $region27: #{tpu_custom_call.1} parent=1 // pred_check_branch
      %227 = sbr.rel (0) target = $region29
    $region28: #{tpu_custom_call.1} parent=1 // pred_region
      %228 = dma.done [#allocation4], 128
    $region29: #{tpu_custom_call.1} parent=1 // pred_fallthru
      _
    %229 = vsyncpa [#allocation3], 1
    %230 = vsyncpa [#allocation6], 1
    %231 = vsyncpa [#allocation4], 1

</llo_original>
